<compile_context>
chip_gen: v5e
topology: v5e:2x2
jax: 0.10.0
libtpu: 0.0.40
codegen_flags: <defaults>
</compile_context>

<pallas_src>
import jax
import jax.numpy as jnp
from jax.experimental import pallas as pl
from jax.experimental.pallas import tpu as pltpu

N_EMBD = 384          # C  (matches train.py n_embd)
BLOCK_SIZE = 32       # max sequence length for the causal mask
HEAD_SIZE = 32        # head_size passed to Head(head_size)


def head_kernel(x_ref, w_ref, o_ref):
    # x_ref: (Bt, T, C) f32 (original dtype, cast in VMEM below)
    # w_ref: (C, 3H)    bf16 fused QKV weights (resident across grid steps)
    # o_ref: (Bt, T*H)  output dtype (lane-dense slab)
    Bt, T, C = x_ref.shape
    H = w_ref.shape[1] // 3

    # ---- fused QKV projection: cast x in VMEM (free VPU op, no extra HBM
    #      pass), one tall bf16 MXU matmul with f32 accumulation ----
    x2d = x_ref[...].reshape(Bt * T, C).astype(w_ref.dtype)
    qkv = jnp.dot(x2d, w_ref[...], preferred_element_type=jnp.float32)   # (Bt*T, 3H) f32
    qkv = qkv.reshape(Bt, T, 3 * H)
    q = qkv[:, :, :H].astype(jnp.bfloat16)
    k = qkv[:, :, H:2 * H].astype(jnp.bfloat16)
    v = qkv[:, :, 2 * H:].astype(jnp.bfloat16)

    # ---- scaled scores (scales by C = n_embd, exactly as the torch code) ----
    scale = jnp.float32(C) ** jnp.float32(-0.5)
    wei = jnp.einsum('bqd,bkd->bqk', q, k,
                     preferred_element_type=jnp.float32) * scale          # (Bt, T, T) f32

    # ---- causal mask: tril(ones(T, T)) == 0  ->  -inf ----
    row = jax.lax.broadcasted_iota(jnp.int32, (T, T), 0)
    col = jax.lax.broadcasted_iota(jnp.int32, (T, T), 1)
    causal = (col <= row)[None, :, :]
    wei = jnp.where(causal, wei, jnp.float32(-jnp.inf))

    # ---- softmax along the last axis (EUP exp + approx reciprocal) ----
    wei = wei - jnp.max(wei, axis=-1, keepdims=True)
    wei = jnp.exp(wei)
    wei = wei * pl.reciprocal(jnp.sum(wei, axis=-1, keepdims=True), approx=True)

    # ---- weighted values (bf16 operands, f32 acc), then lane-dense store ----
    out = jnp.einsum('bqk,bkd->bqd', wei.astype(jnp.bfloat16), v,
                     preferred_element_type=jnp.float32)                  # (Bt, T, H) f32
    o_ref[...] = out.reshape(Bt, T * H).astype(o_ref.dtype)


def fuse_head_weights(w_key, w_query, w_value, *, compute_dtype=jnp.bfloat16):
    """Build the fused (C, 3H) QKV weight ONCE at init (q | k | v sections)."""
    return jnp.concatenate([w_query, w_key, w_value], axis=1).astype(compute_dtype)


def _chip_params():
    """Best-effort (vmem_budget_bytes_for_x_block, num_tensorcores)."""
    vmem_budget = 8 * 1024 * 1024   # conservative: fits v5e's ~16 MiB scoped default
    num_tc = 1
    try:
        info = pltpu.get_tpu_info()
        cap = getattr(info, "vmem_capacity_bytes", None)
        if cap:
            vmem_budget = max(vmem_budget, int(cap) // 4)  # headroom for w/out/intermediates
        num_tc = int(getattr(info, "num_cores", num_tc) or num_tc)
    except Exception:
        pass
    try:
        if "v7" in jax.devices()[0].device_kind.lower():
            num_tc = max(num_tc, 2)   # dual TensorCore chip
    except Exception:
        pass
    return vmem_budget, num_tc


def _pick_block_b(B, T, C, itemsize, vmem_budget, num_tc):
    """Pick the per-step batch block Bt.

    Constraints:
      * Bt divides B (no ragged tail).
      * Output block (Bt, T*H) needs a valid sublane count: Bt % 8 == 0 or Bt == B.
      * Double-buffered x block stays under the generation-aware VMEM budget.
    Preference:
      * dual-TC chips: largest Bt whose step count is a multiple of num_tc
        (balanced megacore sharding of the "parallel" batch axis).
      * single-TC chips: largest Bt (fewest ~0.35 us grid steps).
    """
    divs = [d for d in range(1, B + 1)
            if B % d == 0
            and (d % 8 == 0 or d == B)
            and 2 * d * T * C * itemsize <= vmem_budget]
    if not divs:
        return 1
    if num_tc > 1:
        balanced = [d for d in divs if (B // d) % num_tc == 0]
        if balanced:
            return max(balanced)
    return max(divs)


def head_forward(x, w_qkv):
    """x: (B, T, C) float32;  w_qkv: (C, 3H) fused bf16  ->  (B, T, H) float32."""
    B, T, C = x.shape
    H = w_qkv.shape[1] // 3
    assert T <= BLOCK_SIZE, "sequence length exceeds block_size"

    vmem_budget, num_tc = _chip_params()
    Bt = _pick_block_b(B, T, C, x.dtype.itemsize, vmem_budget, num_tc)
    grid_b = B // Bt

    cost = pl.CostEstimate(
        flops=2 * B * T * C * (3 * H) + 2 * (2 * B * T * T * H),
        transcendentals=B * T * T,
        bytes_accessed=(x.size * x.dtype.itemsize
                        + w_qkv.size * w_qkv.dtype.itemsize
                        + B * T * H * x.dtype.itemsize),
    )

    out_flat = pl.pallas_call(
        head_kernel,
        out_shape=jax.ShapeDtypeStruct((B, T * H), x.dtype),   # lane-dense output slab
        grid_spec=pltpu.PrefetchScalarGridSpec(
            num_scalar_prefetch=0,
            grid=(grid_b,),
            in_specs=[
                pl.BlockSpec((Bt, T, C), lambda b: (b, 0, 0)),   # x, Bt batch rows / step
                pl.BlockSpec((C, 3 * H), lambda b: (0, 0)),      # fused QKV weights (resident)
            ],
            out_specs=pl.BlockSpec((Bt, T * H), lambda b: (b, 0)),
        ),
        compiler_params=pltpu.CompilerParams(
            dimension_semantics=("parallel",),
        ),
        cost_estimate=cost,
    )(x, w_qkv)

    return out_flat.reshape(B, T, H)


def reference_forward(x, w_key, w_query, w_value):
    """Pure-JAX f32 reference mirroring the PyTorch forward (eval-mode dropout)."""
    B, T, C = x.shape
    k = x @ w_key
    q = x @ w_query
    v = x @ w_value
    wei = (q @ jnp.swapaxes(k, -2, -1)) * (C ** -0.5)
    tril = jnp.tril(jnp.ones((T, T), dtype=bool))
    wei = jnp.where(tril, wei, -jnp.inf)
    wei = jax.nn.softmax(wei, axis=-1)
    return wei @ v


if __name__ == "__main__":
    key = jax.random.PRNGKey(0)
    kk, kq, kv, kx1, kx2 = jax.random.split(key, 5)

    C, H = N_EMBD, HEAD_SIZE

    # Deterministic Linear(no-bias) weights, uniform(-1/sqrt(C), 1/sqrt(C)) like torch init.
    bound = 1.0 / (C ** 0.5)
    w_key = jax.random.uniform(kk, (C, H), minval=-bound, maxval=bound, dtype=jnp.float32)
    w_query = jax.random.uniform(kq, (C, H), minval=-bound, maxval=bound, dtype=jnp.float32)
    w_value = jax.random.uniform(kv, (C, H), minval=-bound, maxval=bound, dtype=jnp.float32)

    # Fuse + cast the projection weights exactly once (init-time, not per forward).
    w_qkv = fuse_head_weights(w_key, w_query, w_value)

    # Two configs: a tiny one (single grid step) and one that exercises batch
    # blocking / megacore balancing.
    configs = [((2, 8), kx1), ((16, BLOCK_SIZE), kx2)]

    for (B, T), kx in configs:
        x = jax.random.normal(kx, (B, T, C), dtype=jnp.float32)

        out = head_forward(x, w_qkv)
        out = jax.block_until_ready(out)
        assert out.shape == (B, T, H)

        # Reference with the same bf16-rounded inputs/weights, f32 math throughout.
        # Tolerance covers the kernel's bf16 attention operands + approx reciprocal.
        xr = x.astype(jnp.bfloat16).astype(jnp.float32)
        wkr = w_key.astype(jnp.bfloat16).astype(jnp.float32)
        wqr = w_query.astype(jnp.bfloat16).astype(jnp.float32)
        wvr = w_value.astype(jnp.bfloat16).astype(jnp.float32)
        ref = reference_forward(xr, wkr, wqr, wvr)

        assert jnp.allclose(out, ref, atol=5e-3, rtol=5e-3), (
            f"mismatch vs reference at B={B}, T={T}: "
            f"max abs err {jnp.max(jnp.abs(out - ref))}")

    print("KERNEL_OK")
</pallas_src>

<mosaic_0001>
module attributes {stable_mosaic.version = 11 : i64} {
  func.func @head_kernel(%arg0: i32, %arg1: memref<2x8x384xf32, #tpu.memory_space<vmem>>, %arg2: memref<384x96xbf16, #tpu.memory_space<vmem>>, %arg3: memref<2x256xf32, #tpu.memory_space<vmem>>) attributes {dimension_semantics = [#tpu.dimension_semantics<parallel>], iteration_bounds = array<i64: 1>, scalar_prefetch = 0 : i64, scratch_operands = 0 : i64, tpu.core_type = #tpu.core_type<tc>, window_params = [{transform_indices = @transform_0, window_bounds = array<i64: 2, 8, 384>}, {pipeline_mode = #tpu.pipeline_mode<synchronous>, transform_indices = @transform_1, window_bounds = array<i64: 384, 96>}, {transform_indices = @transform_2, window_bounds = array<i64: 2, 256>}]} {
    %c0 = arith.constant 0 : index
    %c0_0 = arith.constant 0 : index
    %c0_1 = arith.constant 0 : index
    %0 = vector.load %arg1[%c0, %c0_0, %c0_1] : memref<2x8x384xf32, #tpu.memory_space<vmem>>, vector<2x8x384xf32>
    %1 = vector.shape_cast %0 : vector<2x8x384xf32> to vector<16x384xf32>
    %2 = arith.truncf %1 : vector<16x384xf32> to vector<16x384xbf16>
    %c0_2 = arith.constant 0 : index
    %c0_3 = arith.constant 0 : index
    %3 = vector.load %arg2[%c0_2, %c0_3] : memref<384x96xbf16, #tpu.memory_space<vmem>>, vector<384x96xbf16>
    %cst = arith.constant dense<0.000000e+00> : vector<16x96xf32>
    %4 = tpu.matmul %2, %3, %cst {dimension_numbers = #tpu.dot_dimension_numbers<[1], [0], [0], [1], [0, 0, 1, 1], [], []>} : vector<16x384xbf16>, vector<384x96xbf16>, vector<16x96xf32> -> vector<16x96xf32>
    %5 = vector.shape_cast %4 : vector<16x96xf32> to vector<2x8x96xf32>
    %6 = vector.extract_strided_slice %5 {offsets = [0, 0, 0], sizes = [2, 8, 32], strides = [1, 1, 1]} : vector<2x8x96xf32> to vector<2x8x32xf32>
    %7 = arith.truncf %6 : vector<2x8x32xf32> to vector<2x8x32xbf16>
    %8 = vector.extract_strided_slice %5 {offsets = [0, 0, 32], sizes = [2, 8, 32], strides = [1, 1, 1]} : vector<2x8x96xf32> to vector<2x8x32xf32>
    %9 = arith.truncf %8 : vector<2x8x32xf32> to vector<2x8x32xbf16>
    %10 = vector.extract_strided_slice %5 {offsets = [0, 0, 64], sizes = [2, 8, 32], strides = [1, 1, 1]} : vector<2x8x96xf32> to vector<2x8x32xf32>
    %11 = arith.truncf %10 : vector<2x8x32xf32> to vector<2x8x32xbf16>
    %cst_4 = arith.constant 3.840000e+02 : f32
    %cst_5 = arith.constant -5.000000e-01 : f32
    %12 = math.powf %cst_4, %cst_5 : f32
    "tpu.trace_start"() <{level = 10 : i32, message = "bqd,bkd->bqk"}> : () -> ()
    %cst_6 = arith.constant dense<0.000000e+00> : vector<2x8x8xf32>
    %13 = tpu.matmul %7, %9, %cst_6 {dimension_numbers = #tpu.dot_dimension_numbers<[2], [2], [1], [1], [0, 0, 0, 1, 1, 1], [0], [0]>} : vector<2x8x32xbf16>, vector<2x8x32xbf16>, vector<2x8x8xf32> -> vector<2x8x8xf32>
    "tpu.trace_stop"() : () -> ()
    %14 = vector.broadcast %12 : f32 to vector<2x8x8xf32>
    %15 = arith.mulf %13, %14 : vector<2x8x8xf32>
    %16 = tpu.iota {dimensions = array<i32: 0>} : vector<8x8xi32>
    %17 = tpu.iota {dimensions = array<i32: 1>} : vector<8x8xi32>
    %18 = arith.cmpi sle, %17, %16 : vector<8x8xi32>
    %19 = vector.shape_cast %18 : vector<8x8xi1> to vector<1x8x8xi1>
    %cst_7 = arith.constant 0xFF800000 : f32
    %20 = vector.shape_cast %19 : vector<1x8x8xi1> to vector<1x8x8xi1>
    %21 = vector.broadcast %20 : vector<1x8x8xi1> to vector<2x8x8xi1>
    %22 = vector.broadcast %cst_7 : f32 to vector<2x8x8xf32>
    %23 = arith.select %21, %15, %22 : vector<2x8x8xi1>, vector<2x8x8xf32>
    %cst_8 = arith.constant dense<0xFF800000> : vector<2x8xf32>
    %24 = vector.multi_reduction <maximumf>, %23, %cst_8 [2] : vector<2x8x8xf32> to vector<2x8xf32>
    %25 = vector.shape_cast %24 : vector<2x8xf32> to vector<2x8x1xf32>
    %26 = vector.broadcast %25 : vector<2x8x1xf32> to vector<2x8x8xf32>
    %27 = arith.subf %23, %26 : vector<2x8x8xf32>
    %28 = math.exp %27 : vector<2x8x8xf32>
    %cst_9 = arith.constant dense<0.000000e+00> : vector<2x8xf32>
    %29 = vector.multi_reduction <add>, %28, %cst_9 [2] : vector<2x8x8xf32> to vector<2x8xf32>
    %30 = vector.shape_cast %29 : vector<2x8xf32> to vector<2x8x1xf32>
    %31 = tpu.reciprocal %30 {approx = true} : vector<2x8x1xf32> -> vector<2x8x1xf32>
    %32 = vector.broadcast %31 : vector<2x8x1xf32> to vector<2x8x8xf32>
    %33 = arith.mulf %28, %32 : vector<2x8x8xf32>
    %34 = arith.truncf %33 : vector<2x8x8xf32> to vector<2x8x8xbf16>
    "tpu.trace_start"() <{level = 10 : i32, message = "bqk,bkd->bqd"}> : () -> ()
    %cst_10 = arith.constant dense<0.000000e+00> : vector<2x8x32xf32>
    %35 = tpu.matmul %34, %11, %cst_10 {dimension_numbers = #tpu.dot_dimension_numbers<[2], [1], [1], [2], [0, 0, 0, 1, 1, 2], [0], [0]>} : vector<2x8x8xbf16>, vector<2x8x32xbf16>, vector<2x8x32xf32> -> vector<2x8x32xf32>
    "tpu.trace_stop"() : () -> ()
    %36 = vector.shape_cast %35 : vector<2x8x32xf32> to vector<2x256xf32>
    %c0_11 = arith.constant 0 : index
    %c0_12 = arith.constant 0 : index
    %37 = vector.load %arg3[%c0_11, %c0_12] : memref<2x256xf32, #tpu.memory_space<vmem>>, vector<2x256xf32>
    tpu.vector_store %arg3[%c0_11, %c0_12], %36 {strides = array<i32>} : memref<2x256xf32, #tpu.memory_space<vmem>>, vector<2x256xf32>,
    return
  }
  func.func @transform_0(%arg0: i32) -> (i32, i32, i32) {
    %c0_i32 = arith.constant 0 : i32
    %c0_i32_0 = arith.constant 0 : i32
    %c0_i32_1 = arith.constant 0 : i32
    return %arg0, %c0_i32, %c0_i32_0 : i32, i32, i32
  }
  func.func @transform_1(%arg0: i32) -> (i32, i32) {
    %c0_i32 = arith.constant 0 : i32
    %c0_i32_0 = arith.constant 0 : i32
    %c0_i32_1 = arith.constant 0 : i32
    return %c0_i32, %c0_i32_0 : i32, i32
  }
  func.func @transform_2(%arg0: i32) -> (i32, i32) {
    %c0_i32 = arith.constant 0 : i32
    %c0_i32_0 = arith.constant 0 : i32
    return %arg0, %c0_i32 : i32, i32
  }
}

</mosaic_0001>

<llo_original>
// kernel: tpu_custom_call.1
$region0: #{tpu_custom_call.1}
  #allocation0 [shape = 'u32[]', space=smem, size = 0x4, offset = 0x4, fixed_abs, tag = 'smem constant byte address 0x4 - core index']
  #allocation1 [shape = 'u32[72,128]{1,0:T(1,128)}', space=vmem, size = 0x9000, scoped, tag = 'internal scratch']
  %s0 = inlined_call_operand.vmem [shape: f32[2,8,384], index: 0, kind: input, shape index: {}]
  %s1 = inlined_call_operand.vmem [shape: bf16[384,96], index: 1, kind: input, shape index: {}]
  %s2 = inlined_call_operand.hbm [shape: f32[2,256], index: 2, kind: output, shape index: {}]
  %s3 = sld [smem:[#allocation0]]
  $region18: #{tpu_custom_call.1} parent=0
    _
  %s5 = ssub.s32 1, %s3
  %s6 = scalar_select 0, %s5, %s3
  $region1: #{tpu_custom_call.1} parent=0
    #allocation2 [shape = 'u8[2048]{0}', space=vmem, size = 0x800, scoped, tag = 'output window, operand 0, single buffered']
    #allocation3 [shape = 's32[1]{0}', space=sflag, size = 0x4, scoped, tag = 'scoped memory for tpu_custom_call.1']
    %7 = vsyncpa [#allocation3], 0
    // Predicated region
    $region2: #{tpu_custom_call.1} parent=1 // pred_check
      _
    $region3: #{tpu_custom_call.1} parent=1 // pred_check_branch
      %9 = sbr.rel (0) target = $region5
    $region4: #{tpu_custom_call.1} parent=1 // pred_region
      _
    $region5: #{tpu_custom_call.1} parent=1 // pred_fallthru
      _
    // Predicated region
    $region6: #{tpu_custom_call.1} parent=1 // pred_check
      _
    $region7: #{tpu_custom_call.1} parent=1 // pred_check_branch
      %11 = sbr.rel (0) target = $region9
    $region8: #{tpu_custom_call.1} parent=1 // pred_region
      _
    $region9: #{tpu_custom_call.1} parent=1 // pred_fallthru
      _
    %v13 = vld [vmem:[%s0] sm:$0xff]
    %v14 = vld [vmem:[%s0 + $0x8] sm:$0xff]
    %v15 = vld [vmem:[%s0 + $0x10] sm:$0xff]
    %v16 = vld [vmem:[%s0 + $0x18] sm:$0xff]
    %v17 = vld [vmem:[%s0 + $0x20] sm:$0xff]
    %v18 = vld [vmem:[%s0 + $0x28] sm:$0xff]
    %v19 = vpack.c.bf16 %v16, %v13
    %v20 = vpack.c.bf16 %v17, %v14
    %v21 = vpack.c.bf16 %v18, %v15
    %v22 = vld [vmem:[%s1] sm:$0xf]
    %v23 = vld [vmem:[%s1 + $0x4] sm:$0xf]
    %v24 = vld [vmem:[%s1 + $0x8] sm:$0xf]
    %v25 = vld [vmem:[%s1 + $0xc] sm:$0xf]
    %v26 = vld [vmem:[%s1 + $0x10] sm:$0xf]
    %v27 = vld [vmem:[%s1 + $0x14] sm:$0xf]
    %v28 = vld [vmem:[%s1 + $0x18] sm:$0xf]
    %v29 = vld [vmem:[%s1 + $0x1c] sm:$0xf]
    %v30 = vld [vmem:[%s1 + $0x20] sm:$0xf]
    %v31 = vld [vmem:[%s1 + $0x24] sm:$0xf]
    %v32 = vld [vmem:[%s1 + $0x28] sm:$0xf]
    %v33 = vld [vmem:[%s1 + $0x2c] sm:$0xf]
    %v34 = vld [vmem:[%s1 + $0x30] sm:$0xf]
    %v35 = vld [vmem:[%s1 + $0x34] sm:$0xf]
    %v36 = vld [vmem:[%s1 + $0x38] sm:$0xf]
    %v37 = vld [vmem:[%s1 + $0x3c] sm:$0xf]
    %v38 = vld [vmem:[%s1 + $0x40] sm:$0xf]
    %v39 = vld [vmem:[%s1 + $0x44] sm:$0xf]
    %v40 = vld [vmem:[%s1 + $0x48] sm:$0xf]
    %v41 = vld [vmem:[%s1 + $0x4c] sm:$0xf]
    %v42 = vld [vmem:[%s1 + $0x50] sm:$0xf]
    %v43 = vld [vmem:[%s1 + $0x54] sm:$0xf]
    %v44 = vld [vmem:[%s1 + $0x58] sm:$0xf]
    %v45 = vld [vmem:[%s1 + $0x5c] sm:$0xf]
    %v46 = vld [vmem:[%s1 + $0x60] sm:$0xf]
    %v47 = vld [vmem:[%s1 + $0x64] sm:$0xf]
    %v48 = vld [vmem:[%s1 + $0x68] sm:$0xf]
    %v49 = vld [vmem:[%s1 + $0x6c] sm:$0xf]
    %v50 = vld [vmem:[%s1 + $0x70] sm:$0xf]
    %v51 = vld [vmem:[%s1 + $0x74] sm:$0xf]
    %v52 = vld [vmem:[%s1 + $0x78] sm:$0xf]
    %v53 = vld [vmem:[%s1 + $0x7c] sm:$0xf]
    %v54 = vld [vmem:[%s1 + $0x80] sm:$0xf]
    %v55 = vld [vmem:[%s1 + $0x84] sm:$0xf]
    %v56 = vld [vmem:[%s1 + $0x88] sm:$0xf]
    %v57 = vld [vmem:[%s1 + $0x8c] sm:$0xf]
    %v58 = vld [vmem:[%s1 + $0x90] sm:$0xf]
    %v59 = vld [vmem:[%s1 + $0x94] sm:$0xf]
    %v60 = vld [vmem:[%s1 + $0x98] sm:$0xf]
    %v61 = vld [vmem:[%s1 + $0x9c] sm:$0xf]
    %v62 = vld [vmem:[%s1 + $0xa0] sm:$0xf]
    %v63 = vld [vmem:[%s1 + $0xa4] sm:$0xf]
    %v64 = vld [vmem:[%s1 + $0xa8] sm:$0xf]
    %v65 = vld [vmem:[%s1 + $0xac] sm:$0xf]
    %v66 = vld [vmem:[%s1 + $0xb0] sm:$0xf]
    %v67 = vld [vmem:[%s1 + $0xb4] sm:$0xf]
    %v68 = vld [vmem:[%s1 + $0xb8] sm:$0xf]
    %v69 = vld [vmem:[%s1 + $0xbc] sm:$0xf]
    %v118 = vunpack.c.l.b16 %v22
    %v119 = vunpack.c.l.b16 %v23
    %v120 = vunpack.c.l.b16 %v24
    %v121 = vunpack.c.l.b16 %v25
    %v122 = vunpack.c.l.b16 %v26
    %v123 = vunpack.c.l.b16 %v27
    %v124 = vunpack.c.l.b16 %v28
    %v125 = vunpack.c.l.b16 %v29
    %v126 = vunpack.c.l.b16 %v30
    %v127 = vunpack.c.l.b16 %v31
    %v128 = vunpack.c.l.b16 %v32
    %v129 = vunpack.c.l.b16 %v33
    %v130 = vunpack.c.l.b16 %v34
    %v131 = vunpack.c.l.b16 %v35
    %v132 = vunpack.c.l.b16 %v36
    %v133 = vunpack.c.l.b16 %v37
    %v134 = vunpack.c.l.b16 %v38
    %v135 = vunpack.c.l.b16 %v39
    %v136 = vunpack.c.l.b16 %v40
    %v137 = vunpack.c.l.b16 %v41
    %v138 = vunpack.c.l.b16 %v42
    %v139 = vunpack.c.l.b16 %v43
    %v140 = vunpack.c.l.b16 %v44
    %v141 = vunpack.c.l.b16 %v45
    %v142 = vunpack.c.l.b16 %v46
    %v143 = vunpack.c.l.b16 %v47
    %v144 = vunpack.c.l.b16 %v48
    %v145 = vunpack.c.l.b16 %v49
    %v146 = vunpack.c.l.b16 %v50
    %v147 = vunpack.c.l.b16 %v51
    %v148 = vunpack.c.l.b16 %v52
    %v149 = vunpack.c.l.b16 %v53
    %v150 = vunpack.c.l.b16 %v54
    %v151 = vunpack.c.l.b16 %v55
    %v152 = vunpack.c.l.b16 %v56
    %v153 = vunpack.c.l.b16 %v57
    %v154 = vunpack.c.l.b16 %v58
    %v155 = vunpack.c.l.b16 %v59
    %v156 = vunpack.c.l.b16 %v60
    %v157 = vunpack.c.l.b16 %v61
    %v158 = vunpack.c.l.b16 %v62
    %v159 = vunpack.c.l.b16 %v63
    %v160 = vunpack.c.l.b16 %v64
    %v161 = vunpack.c.l.b16 %v65
    %v162 = vunpack.c.l.b16 %v66
    %v163 = vunpack.c.l.b16 %v67
    %v164 = vunpack.c.l.b16 %v68
    %v165 = vunpack.c.l.b16 %v69
    %v166 = vpack.c.b16 %v119, %v118
    %v167 = vpack.c.b16 %v121, %v120
    %v168 = vpack.c.b16 %v123, %v122
    %v169 = vpack.c.b16 %v125, %v124
    %v170 = vpack.c.b16 %v127, %v126
    %v171 = vpack.c.b16 %v129, %v128
    %v172 = vpack.c.b16 %v131, %v130
    %v173 = vpack.c.b16 %v133, %v132
    %v174 = vpack.c.b16 %v135, %v134
    %v175 = vpack.c.b16 %v137, %v136
    %v176 = vpack.c.b16 %v139, %v138
    %v177 = vpack.c.b16 %v141, %v140
    %v178 = vpack.c.b16 %v143, %v142
    %v179 = vpack.c.b16 %v145, %v144
    %v180 = vpack.c.b16 %v147, %v146
    %v181 = vpack.c.b16 %v149, %v148
    %v182 = vpack.c.b16 %v151, %v150
    %v183 = vpack.c.b16 %v153, %v152
    %v184 = vpack.c.b16 %v155, %v154
    %v185 = vpack.c.b16 %v157, %v156
    %v186 = vpack.c.b16 %v159, %v158
    %v187 = vpack.c.b16 %v161, %v160
    %v188 = vpack.c.b16 %v163, %v162
    %v189 = vpack.c.b16 %v165, %v164
    %214 = vmatpush.bf16.msra.mxu0 %v173
    %215 = vmatpush.bf16.msra.mxu0 %v172
    %216 = vmatpush.bf16.msra.mxu0 %v171
    %217 = vmatpush.bf16.msra.mxu0 %v170
    %218 = vmatpush.bf16.msra.mxu0 %v169
    %219 = vmatpush.bf16.msra.mxu0 %v168
    %220 = vmatpush.bf16.msra.mxu0 %v167
    %221 = vmatpush.bf16.msra.mxu0 %v166
    %222 = vmatmul.bf16.gmra.mxu0 %v19
    %v223 = vpop.f32.mrf.mxu0
    %v224 = vadd.f32 0.0, %v223
    %v225 = vpop.f32.mrf.mxu0
    %v226 = vadd.f32 0.0, %v225
    %227 = vdwg.mxu0
    %228 = vmatpush.bf16.msra.mxu0 %v181
    %229 = vmatpush.bf16.msra.mxu0 %v180
    %230 = vmatpush.bf16.msra.mxu0 %v179
    %231 = vmatpush.bf16.msra.mxu0 %v178
    %232 = vmatpush.bf16.msra.mxu0 %v177
    %233 = vmatpush.bf16.msra.mxu0 %v176
    %234 = vmatpush.bf16.msra.mxu0 %v175
    %235 = vmatpush.bf16.msra.mxu0 %v174
    %236 = vmatmul.bf16.gmra.mxu0 %v20
    %v237 = vpop.f32.mrf.mxu0
    %v238 = vadd.f32 %v224, %v237
    %v239 = vpop.f32.mrf.mxu0
    %v240 = vadd.f32 %v226, %v239
    %241 = vdwg.mxu0
    %242 = vmatpush.bf16.msra.mxu0 %v189
    %243 = vmatpush.bf16.msra.mxu0 %v188
    %244 = vmatpush.bf16.msra.mxu0 %v187
    %245 = vmatpush.bf16.msra.mxu0 %v186
    %246 = vmatpush.bf16.msra.mxu0 %v185
    %247 = vmatpush.bf16.msra.mxu0 %v184
    %248 = vmatpush.bf16.msra.mxu0 %v183
    %249 = vmatpush.bf16.msra.mxu0 %v182
    %250 = vmatmul.bf16.gmra.mxu0 %v21
    %v251 = vpop.f32.mrf.mxu0
    %v252 = vadd.f32 %v238, %v251
    %v253 = vpop.f32.mrf.mxu0
    %v254 = vadd.f32 %v240, %v253
    %255 = vdwg.mxu0
    %v256 = vpack.c.bf16 %v252, %v252
    %v257 = vpack.c.bf16 %v254, %v254
    %v259 = vunpack.c.l.b16 %v256
    %v260 = vpack.c.b16 %v259, %v259
    %261 = vrot.lane.b32.xlu0 %v260, 96
    %v262 = vpop.permute.xlu0 %261
    %vm263 = vcmask 261120
    %v265 = vsel %vm263, %v256, 0
    %v268 = vsel %vm263, %v262, 0
    %270 = vmatpush.bf16.xpose.msra.mxu0 0
    %271 = vmatpush.bf16.xpose.msra.mxu0 0
    %272 = vmatpush.bf16.xpose.msra.mxu0 0
    %273 = vmatpush.bf16.xpose.msra.mxu0 0
    %274 = vmatpush.bf16.xpose.msra.mxu0 0
    %275 = vmatpush.bf16.xpose.msra.mxu0 0
    %276 = vmatpush.bf16.xpose.msra.mxu0 0
    %277 = vmatpush.bf16.xpose.msra.mxu0 %v268
    %278 = vmatmul.bf16.gmra.mxu0 %v265
    %v279 = vpop.f32.mrf.mxu0
    %v280 = vadd.f32 0.0, %v279
    %v281 = vpop.f32.mrf.mxu0
    %282 = vdwg.mxu0
    %v284 = vunpack.c.l.b16 %v257
    %v285 = vpack.c.b16 %v284, %v284
    %286 = vrot.lane.b32.xlu0 %v285, 96
    %v287 = vpop.permute.xlu0 %286
    %v289 = vsel %vm263, %v257, 0
    %v292 = vsel %vm263, %v287, 0
    %294 = vmatpush.bf16.xpose.msra.mxu0 0
    %295 = vmatpush.bf16.xpose.msra.mxu0 0
    %296 = vmatpush.bf16.xpose.msra.mxu0 0
    %297 = vmatpush.bf16.xpose.msra.mxu0 0
    %298 = vmatpush.bf16.xpose.msra.mxu0 0
    %299 = vmatpush.bf16.xpose.msra.mxu0 0
    %300 = vmatpush.bf16.xpose.msra.mxu0 0
    %301 = vmatpush.bf16.xpose.msra.mxu0 %v292
    %302 = vmatmul.bf16.gmra.mxu0 %v289
    %v303 = vpop.f32.mrf.mxu0
    %v304 = vadd.f32 0.0, %v303
    %v305 = vpop.f32.mrf.mxu0
    %306 = vdwg.mxu0
    %v307 = vmul.f32 %v280, 0.05103104
    %v308 = vmul.f32 %v304, 0.05103104
    %v309 = vlaneseq
    %v310 = vshrl.u32 %v309, 7
    %v311 = vlaneseq
    %v312 = vand.u32 %v311, 127
    %vm313 = vcmp.le.s32.totalorder %v312, %v310
    %v314 = vsel %vm313, 1, 0
    %vm315 = vcmp.eq.s32.totalorder %v314, 1
    %v316 = vsel %vm315, %v307, -inf
    %v317 = vsel %vm315, %v308, -inf
    %vm318 = vcmask 64512
    %v319 = vsel %vm318, %v316, -inf
    %320 = vmax.xlane.f32.xlu0 %v319
    %v321 = vpop.xlane.xlu0 %320
    %v322 = vsel %vm318, %v317, -inf
    %323 = vmax.xlane.f32.xlu0 %v322
    %v324 = vpop.xlane.xlu0 %323
    %v325 = vsub.f32 %v316, %v321
    %v326 = vsub.f32 %v317, %v324
    %v327 = vmul.f32 %v325, 1.442695
    %v328 = vpow.pop %v327
    %v329 = vmul.f32 %v326, 1.442695
    %v330 = vpow.pop %v329
    %v331 = vsel %vm318, %v328, 0.0
    %332 = vadd.xlane.f32.xlu0 %v331
    %v333 = vpop.xlane.xlu0 %332
    %v334 = vsel %vm318, %v330, 0.0
    %335 = vadd.xlane.f32.xlu0 %v334
    %v336 = vpop.xlane.xlu0 %335
    %v337 = vrcp.pop %v333
    %v338 = vrcp.pop %v336
    %v339 = vmul.f32 %v328, %v337
    %v340 = vmul.f32 %v330, %v338
    %v341 = vpack.c.bf16 %v339, %v339
    %v342 = vpack.c.bf16 %v340, %v340
    %343 = vrot.lane.b32.xlu0 %v260, 64
    %v344 = vpop.permute.xlu0 %343
    %v346 = vsel %vm318, %v341, 0
    %vm348 = vcmask 1043456
    %v350 = vsel %vm348, %v344, 0
    %352 = vmatpush.bf16.msra.mxu0 0
    %353 = vmatpush.bf16.msra.mxu0 0
    %354 = vmatpush.bf16.msra.mxu0 0
    %355 = vmatpush.bf16.msra.mxu0 0
    %356 = vmatpush.bf16.msra.mxu0 0
    %357 = vmatpush.bf16.msra.mxu0 0
    %358 = vmatpush.bf16.msra.mxu0 0
    %359 = vmatpush.bf16.msra.mxu0 %v350
    %360 = vmatmul.bf16.gmra.mxu0 %v346
    %v361 = vpop.f32.mrf.mxu0
    %v362 = vadd.f32 0.0, %v361
    %v363 = vpop.f32.mrf.mxu0
    %364 = vdwg.mxu0
    %365 = vrot.lane.b32.xlu0 %v285, 64
    %v366 = vpop.permute.xlu0 %365
    %v368 = vsel %vm318, %v342, 0
    %v371 = vsel %vm348, %v366, 0
    %373 = vmatpush.bf16.msra.mxu0 0
    %374 = vmatpush.bf16.msra.mxu0 0
    %375 = vmatpush.bf16.msra.mxu0 0
    %376 = vmatpush.bf16.msra.mxu0 0
    %377 = vmatpush.bf16.msra.mxu0 0
    %378 = vmatpush.bf16.msra.mxu0 0
    %379 = vmatpush.bf16.msra.mxu0 0
    %380 = vmatpush.bf16.msra.mxu0 %v371
    %381 = vmatmul.bf16.gmra.mxu0 %v368
    %v382 = vpop.f32.mrf.mxu0
    %v383 = vadd.f32 0.0, %v382
    %v384 = vpop.f32.mrf.mxu0
    %385 = vdwg.mxu0
    %v386 = vrot.slane %v362, 4
    %vm387 = vcmask 1047556
    %v388 = vsel %vm387, 0.0, %v386
    %v390 = vunpack.c.l.s4 1983009808
    %v391 = vunpack.c.0.s8 %v390
    %v392 = vperm.slane %v362, %v391
    %v394 = vunpack.c.l.s4 1983009808
    %v395 = vunpack.c.0.s8 %v394
    %v396 = vperm.slane %v388, %v395
    %v397 = vrot.slane %v383, 4
    %v398 = vsel %vm387, 0.0, %v397
    %v400 = vunpack.c.l.s4 1983009808
    %v401 = vunpack.c.0.s8 %v400
    %v402 = vperm.slane %v383, %v401
    %v404 = vunpack.c.l.s4 1983009808
    %v405 = vunpack.c.0.s8 %v404
    %v406 = vperm.slane %v398, %v405
    %v407 = vrot.slane %v402, 4
    %v408 = vsel %vm387, %v407, %v392
    %v409 = vrot.slane %v392, 4
    %v410 = vsel %vm387, %v402, %v409
    %v412 = vunpack.c.l.s4 1934713408
    %v413 = vunpack.c.0.s8 %v412
    %v414 = vperm.slane %v408, %v413
    %v416 = vunpack.c.l.s4 1934713408
    %v417 = vunpack.c.0.s8 %v416
    %v418 = vperm.slane %v410, %v417
    %v419 = vrot.slane %v406, 4
    %v420 = vsel %vm387, %v419, %v396
    %v421 = vrot.slane %v396, 4
    %v422 = vsel %vm387, %v406, %v421
    %v424 = vunpack.c.l.s4 1934713408
    %v425 = vunpack.c.0.s8 %v424
    %v426 = vperm.slane %v420, %v425
    %v428 = vunpack.c.l.s4 1934713408
    %v429 = vunpack.c.0.s8 %v428
    %v430 = vperm.slane %v422, %v429
    %v431 = vrot.slane %v414, 4
    %v432 = vsel %vm387, 0.0, %v431
    %v433 = vrot.slane %v418, 4
    %v434 = vsel %vm387, 0.0, %v433
    %v435 = vrot.slane %v426, 4
    %v436 = vsel %vm387, 0.0, %v435
    %v437 = vrot.slane %v430, 4
    %v438 = vsel %vm387, 0.0, %v437
    %440 = vrot.lane.b32.xlu0 %v432, 32
    %v441 = vpop.permute.xlu0 %440
    %444 = vrot.lane.b32.xlu0 %v418, 64
    %v445 = vpop.permute.xlu0 %444
    %448 = vrot.lane.b32.xlu0 %v434, 96
    %v449 = vpop.permute.xlu0 %448
    %452 = vrot.lane.b32.xlu0 %v436, 32
    %v453 = vpop.permute.xlu0 %452
    %456 = vrot.lane.b32.xlu0 %v430, 64
    %v457 = vpop.permute.xlu0 %456
    %460 = vrot.lane.b32.xlu0 %v438, 96
    %v461 = vpop.permute.xlu0 %460
    %v463 = vsel %vm263, %v414, %v441
    %vm464 = vcmask 523264
    %v465 = vsel %vm464, %v463, %v445
    %vm466 = vcmask 785408
    %v467 = vsel %vm466, %v465, %v449
    %v468 = vsel %vm263, %v426, %v453
    %v469 = vsel %vm464, %v468, %v457
    %v470 = vsel %vm466, %v469, %v461
    %v473 = vrot.slane %v470, 6
    %vm474 = vcmask 1041408
    %v475 = vsel %vm474, %v467, %v473
    %477 = vst [vmem:[#allocation2] sm:$0xf] %v475
    // Predicated region
    $region10: #{tpu_custom_call.1} parent=1 // pred_check
      _
    $region11: #{tpu_custom_call.1} parent=1 // pred_check_branch
      %479 = sbr.rel (0) target = $region13
    $region12: #{tpu_custom_call.1} parent=1 // pred_region
      %481 = vsyncadd [#allocation3], 0
      %s483 = sshll.u32 [#allocation2], 4
      %s484 = int_to_ptr.vmem [resolvable:$true] %s483
      %s485 = sshll.u32 %s2, 4
      %s486 = int_to_ptr.hbm [resolvable:$true] %s485
      %488 = dma.vmem_to_hbm [thread:$0]  %s484, 64, %s486, [#allocation3]
    $region13: #{tpu_custom_call.1} parent=1 // pred_fallthru
      _
    // Predicated region
    $region14: #{tpu_custom_call.1} parent=1 // pred_check
      _
    $region15: #{tpu_custom_call.1} parent=1 // pred_check_branch
      %490 = sbr.rel (0) target = $region17
    $region16: #{tpu_custom_call.1} parent=1 // pred_region
      %492 = dma.done [#allocation3], 64
    $region17: #{tpu_custom_call.1} parent=1 // pred_fallthru
      _
    %493 = vsyncpa [#allocation3], 1

</llo_original>
